<compile_context>
chip_gen: v7x
topology: tpu7x:2x2x1
jax: 0.10.0
libtpu: 0.0.40
codegen_flags: <defaults>
</compile_context>

<pallas_src>
import jax
import jax.numpy as jnp
from jax.experimental import pallas as pl
from jax.experimental.pallas import tpu as pltpu


def channel_gate_kernel(x_ref, w1_ref, b1_ref, w2_ref, b2_ref, o_ref):
    # x_ref / o_ref block: (Bt, C, HW) — channels on sublanes, spatial on lanes.
    # w1: (C, Cr), b1: (1, Cr), w2: (Cr, C), b2: (1, C)
    bt = x_ref.shape[0]
    x = x_ref[...]                                           # native dtype tile

    # Global pooling over the spatial (lane) axis; accumulate in f32 without
    # materializing a full f32 copy of the tile.
    avg_pool = jnp.mean(x, axis=-1, dtype=jnp.float32)       # (Bt, C)
    max_pool = jnp.max(x, axis=-1).astype(jnp.float32)       # (Bt, C)

    w1 = w1_ref[...].astype(jnp.float32)
    b1 = b1_ref[...].astype(jnp.float32)
    w2 = w2_ref[...].astype(jnp.float32)
    b2 = b2_ref[...].astype(jnp.float32)

    # Shared MLP applied once to the stacked [avg; max] pooled rows
    # (one dot per layer instead of two M=1 matmuls).
    p = jnp.concatenate([avg_pool, max_pool], axis=0)        # (2*Bt, C)
    h = jnp.maximum(jnp.dot(p, w1, preferred_element_type=jnp.float32) + b1, 0.0)
    att = jnp.dot(h, w2, preferred_element_type=jnp.float32) + b2   # (2*Bt, C)
    channel_att_sum = att[:bt] + att[bt:]                    # (Bt, C)

    # Per-(batch, channel) gate, broadcast along lanes; multiply in the
    # native dtype so no full-tile f32 copy is stored.
    scale = jax.nn.sigmoid(channel_att_sum).astype(o_ref.dtype)     # (Bt, C)
    o_ref[...] = x * scale[:, :, None]


def _pick_batch_tile(B, per_image_bytes, max_block_bytes, target_block_bytes=1 << 20):
    """Largest-enough divisor of B: block >= ~1 MiB if possible, block <= max,
    and keep >= 2 grid points when B >= 2 (v7x dual-TensorCore sharding)."""
    best = 1
    for d in range(1, B + 1):
        if B % d:
            continue
        if d * per_image_bytes > max_block_bytes:
            break                       # divisors only grow from here
        if B >= 2 and B // d < 2:
            continue                    # keep at least 2 grid points
        best = d
        if d * per_image_bytes >= target_block_bytes:
            break                       # big enough; keep more grid points
    return best


def channel_gate(x_nchw, w1, b1, w2, b2, *, max_block_bytes=6 * 1024 * 1024):
    """x_nchw: (B, C, H, W). Returns (B, C, H, W); same semantics as
    ChannelGate.forward with pool_types=['avg', 'max']."""
    B, C, H, W = x_nchw.shape
    HW = H * W
    Cr = w1.shape[1]

    # Free reshapes: NCHW is already contiguous as (B, C, H*W).
    x = x_nchw.reshape(B, C, HW)
    b1_2d = b1.reshape(1, Cr)
    b2_2d = b2.reshape(1, C)

    per_image_bytes = C * HW * x.dtype.itemsize
    bt = _pick_batch_tile(B, per_image_bytes, max_block_bytes)
    grid = B // bt

    # Double-buffered input + output blocks ≈ 4x block bytes; bound explicitly
    # so v7x (64 MiB physical / 32 MiB default scoped VMEM) does not overflow.
    # TODO(synk): for single images whose C*H*W block exceeds max_block_bytes,
    # switch to a two-pass HW-tiled grid (accumulate sum/max, then re-stream).
    block_bytes = bt * per_image_bytes
    vmem_limit = int(min(max(4 * block_bytes + (4 << 20), 32 << 20), 56 << 20))

    out = pl.pallas_call(
        channel_gate_kernel,
        out_shape=jax.ShapeDtypeStruct((B, C, HW), x_nchw.dtype),
        grid_spec=pltpu.PrefetchScalarGridSpec(
            num_scalar_prefetch=0,
            grid=(grid,),
            in_specs=[
                pl.BlockSpec((bt, C, HW), lambda b: (b, 0, 0)),
                pl.BlockSpec((C, Cr), lambda b: (0, 0)),
                pl.BlockSpec((1, Cr), lambda b: (0, 0)),
                pl.BlockSpec((Cr, C), lambda b: (0, 0)),
                pl.BlockSpec((1, C), lambda b: (0, 0)),
            ],
            out_specs=pl.BlockSpec((bt, C, HW), lambda b: (b, 0, 0)),
        ),
        compiler_params=pltpu.CompilerParams(
            dimension_semantics=("parallel",),
            vmem_limit_bytes=vmem_limit,
        ),
    )(x, w1, b1_2d, w2, b2_2d)

    return out.reshape(B, C, H, W)


def channel_gate_reference(x_nchw, w1, b1, w2, b2):
    """Pure-JAX reference mirroring the PyTorch module (avg + max pooling)."""
    B, C, H, W = x_nchw.shape
    xf = x_nchw.astype(jnp.float32)
    avg_pool = jnp.mean(xf.reshape(B, C, H * W), axis=2)      # (B, C)
    max_pool = jnp.max(xf.reshape(B, C, H * W), axis=2)       # (B, C)

    def mlp(p):
        h = jnp.maximum(p @ w1 + b1, 0.0)
        return h @ w2 + b2

    att = mlp(avg_pool) + mlp(max_pool)                       # (B, C)
    scale = jax.nn.sigmoid(att)[:, :, None, None]             # (B, C, 1, 1)
    return (xf * scale).astype(x_nchw.dtype)


# TODO(synk): 'lp' and 'lse' pool_types of ChannelGate are not implemented;
# only the default pool_types=['avg', 'max'] path is translated.


if __name__ == "__main__":
    # Small shapes consistent with ChannelGate(gate_channels=32, reduction_ratio=16).
    # H=W=16 -> H*W=256 on lanes (lane-dense, multiple of 128).
    B, C, H, W = 2, 32, 16, 16
    reduction_ratio = 16
    Cr = C // reduction_ratio

    key = jax.random.PRNGKey(0)
    kx, k1, k2, k3, k4 = jax.random.split(key, 5)

    x = jax.random.normal(kx, (B, C, H, W), dtype=jnp.float32)
    # Synthetic parameters for nn.Linear(C, C//r) then nn.Linear(C//r, C).
    w1 = jax.random.normal(k1, (C, Cr), dtype=jnp.float32) * 0.1
    b1 = jax.random.normal(k2, (Cr,), dtype=jnp.float32) * 0.1
    w2 = jax.random.normal(k3, (Cr, C), dtype=jnp.float32) * 0.1
    b2 = jax.random.normal(k4, (C,), dtype=jnp.float32) * 0.1

    out = channel_gate(x, w1, b1, w2, b2)
    out = jax.block_until_ready(out)

    ref = channel_gate_reference(x, w1, b1, w2, b2)
    assert out.shape == (B, C, H, W), out.shape
    assert jnp.allclose(out, ref, atol=1e-5, rtol=1e-5), "mismatch vs reference"

    print("KERNEL_OK")
</pallas_src>

<mosaic_0001>
module attributes {stable_mosaic.version = 11 : i64} {
  func.func @channel_gate_kernel(%arg0: i32, %arg1: memref<1x32x256xf32, #tpu.memory_space<vmem>>, %arg2: memref<32x2xf32, #tpu.memory_space<vmem>>, %arg3: memref<1x2xf32, #tpu.memory_space<vmem>>, %arg4: memref<2x32xf32, #tpu.memory_space<vmem>>, %arg5: memref<1x32xf32, #tpu.memory_space<vmem>>, %arg6: memref<1x32x256xf32, #tpu.memory_space<vmem>>) attributes {dimension_semantics = [#tpu.dimension_semantics<parallel>], iteration_bounds = array<i64: 2>, scalar_prefetch = 0 : i64, scratch_operands = 0 : i64, tpu.core_type = #tpu.core_type<tc>, window_params = [{transform_indices = @transform_0, window_bounds = array<i64: 1, 32, 256>}, {pipeline_mode = #tpu.pipeline_mode<synchronous>, transform_indices = @transform_1, window_bounds = array<i64: 32, 2>}, {pipeline_mode = #tpu.pipeline_mode<synchronous>, transform_indices = @transform_2, window_bounds = array<i64: 1, 2>}, {pipeline_mode = #tpu.pipeline_mode<synchronous>, transform_indices = @transform_3, window_bounds = array<i64: 2, 32>}, {pipeline_mode = #tpu.pipeline_mode<synchronous>, transform_indices = @transform_4, window_bounds = array<i64: 1, 32>}, {transform_indices = @transform_5, window_bounds = array<i64: 1, 32, 256>}]} {
    %c0 = arith.constant 0 : index
    %c0_0 = arith.constant 0 : index
    %c0_1 = arith.constant 0 : index
    %0 = vector.load %arg1[%c0, %c0_0, %c0_1] : memref<1x32x256xf32, #tpu.memory_space<vmem>>, vector<1x32x256xf32>
    %cst = arith.constant dense<0.000000e+00> : vector<1x32xf32>
    %1 = vector.multi_reduction <add>, %0, %cst [2] : vector<1x32x256xf32> to vector<1x32xf32>
    %cst_2 = arith.constant 2.560000e+02 : f32
    %2 = vector.broadcast %cst_2 : f32 to vector<1x32xf32>
    %3 = arith.divf %1, %2 : vector<1x32xf32>
    %cst_3 = arith.constant dense<0xFF800000> : vector<1x32xf32>
    %4 = vector.multi_reduction <maximumf>, %0, %cst_3 [2] : vector<1x32x256xf32> to vector<1x32xf32>
    %c0_4 = arith.constant 0 : index
    %c0_5 = arith.constant 0 : index
    %5 = vector.load %arg2[%c0_4, %c0_5] : memref<32x2xf32, #tpu.memory_space<vmem>>, vector<32x2xf32>
    %c0_6 = arith.constant 0 : index
    %c0_7 = arith.constant 0 : index
    %6 = vector.load %arg3[%c0_6, %c0_7] : memref<1x2xf32, #tpu.memory_space<vmem>>, vector<1x2xf32>
    %c0_8 = arith.constant 0 : index
    %c0_9 = arith.constant 0 : index
    %7 = vector.load %arg4[%c0_8, %c0_9] : memref<2x32xf32, #tpu.memory_space<vmem>>, vector<2x32xf32>
    %c0_10 = arith.constant 0 : index
    %c0_11 = arith.constant 0 : index
    %8 = vector.load %arg5[%c0_10, %c0_11] : memref<1x32xf32, #tpu.memory_space<vmem>>, vector<1x32xf32>
    %9 = tpu.concatenate %3, %4 in 0 : vector<1x32xf32>, vector<1x32xf32> -> vector<2x32xf32>
    %cst_12 = arith.constant dense<0.000000e+00> : vector<2x2xf32>
    %10 = tpu.matmul %9, %5, %cst_12 {dimension_numbers = #tpu.dot_dimension_numbers<[1], [0], [0], [1], [0, 0, 1, 1], [], []>} : vector<2x32xf32>, vector<32x2xf32>, vector<2x2xf32> -> vector<2x2xf32>
    %11 = vector.broadcast %6 : vector<1x2xf32> to vector<2x2xf32>
    %12 = arith.addf %10, %11 : vector<2x2xf32>
    %cst_13 = arith.constant 0.000000e+00 : f32
    %13 = vector.broadcast %cst_13 : f32 to vector<2x2xf32>
    %14 = arith.maximumf %12, %13 : vector<2x2xf32>
    %cst_14 = arith.constant dense<0.000000e+00> : vector<2x32xf32>
    %15 = tpu.matmul %14, %7, %cst_14 {dimension_numbers = #tpu.dot_dimension_numbers<[1], [0], [0], [1], [0, 0, 1, 1], [], []>} : vector<2x2xf32>, vector<2x32xf32>, vector<2x32xf32> -> vector<2x32xf32>
    %16 = vector.broadcast %8 : vector<1x32xf32> to vector<2x32xf32>
    %17 = arith.addf %15, %16 : vector<2x32xf32>
    %18 = vector.extract_strided_slice %17 {offsets = [0, 0], sizes = [1, 32], strides = [1, 1]} : vector<2x32xf32> to vector<1x32xf32>
    %19 = vector.extract_strided_slice %17 {offsets = [1, 0], sizes = [1, 32], strides = [1, 1]} : vector<2x32xf32> to vector<1x32xf32>
    %20 = arith.addf %18, %19 : vector<1x32xf32>
    %21 = arith.negf %20 : vector<1x32xf32>
    %22 = math.exp %21 : vector<1x32xf32>
    %cst_15 = arith.constant 1.000000e+00 : f32
    %23 = vector.broadcast %cst_15 : f32 to vector<1x32xf32>
    %24 = arith.addf %23, %22 : vector<1x32xf32>
    %25 = arith.divf %23, %24 : vector<1x32xf32>
    %26 = vector.shape_cast %25 : vector<1x32xf32> to vector<1x32x1xf32>
    %27 = vector.broadcast %26 : vector<1x32x1xf32> to vector<1x32x256xf32>
    %28 = arith.mulf %0, %27 : vector<1x32x256xf32>
    %c0_16 = arith.constant 0 : index
    %c0_17 = arith.constant 0 : index
    %c0_18 = arith.constant 0 : index
    %29 = vector.load %arg6[%c0_16, %c0_17, %c0_18] : memref<1x32x256xf32, #tpu.memory_space<vmem>>, vector<1x32x256xf32>
    tpu.vector_store %arg6[%c0_16, %c0_17, %c0_18], %28 {strides = array<i32>} : memref<1x32x256xf32, #tpu.memory_space<vmem>>, vector<1x32x256xf32>,
    return
  }
  func.func @transform_0(%arg0: i32) -> (i32, i32, i32) {
    %c0_i32 = arith.constant 0 : i32
    %c0_i32_0 = arith.constant 0 : i32
    %c0_i32_1 = arith.constant 0 : i32
    return %arg0, %c0_i32, %c0_i32_0 : i32, i32, i32
  }
  func.func @transform_1(%arg0: i32) -> (i32, i32) {
    %c0_i32 = arith.constant 0 : i32
    %c0_i32_0 = arith.constant 0 : i32
    %c0_i32_1 = arith.constant 0 : i32
    return %c0_i32, %c0_i32_0 : i32, i32
  }
  func.func @transform_2(%arg0: i32) -> (i32, i32) {
    %c0_i32 = arith.constant 0 : i32
    %c0_i32_0 = arith.constant 0 : i32
    %c0_i32_1 = arith.constant 0 : i32
    return %c0_i32, %c0_i32_0 : i32, i32
  }
  func.func @transform_3(%arg0: i32) -> (i32, i32) {
    %c0_i32 = arith.constant 0 : i32
    %c0_i32_0 = arith.constant 0 : i32
    %c0_i32_1 = arith.constant 0 : i32
    return %c0_i32, %c0_i32_0 : i32, i32
  }
  func.func @transform_4(%arg0: i32) -> (i32, i32) {
    %c0_i32 = arith.constant 0 : i32
    %c0_i32_0 = arith.constant 0 : i32
    %c0_i32_1 = arith.constant 0 : i32
    return %c0_i32, %c0_i32_0 : i32, i32
  }
  func.func @transform_5(%arg0: i32) -> (i32, i32, i32) {
    %c0_i32 = arith.constant 0 : i32
    %c0_i32_0 = arith.constant 0 : i32
    %c0_i32_1 = arith.constant 0 : i32
    return %arg0, %c0_i32, %c0_i32_0 : i32, i32, i32
  }
}

</mosaic_0001>

<llo_original>
// kernel: tpu_custom_call.1
$region0: #{tpu_custom_call.1}
  #allocation0 [shape = 'u32[]', space=smem, size = 0x4, offset = 0x4, fixed_abs, tag = 'smem constant byte address 0x4 - core index']
  #allocation1 [shape = 'u32[144,128]{1,0:T(1,128)}', space=vmem, size = 0x12000, scoped, tag = 'internal scratch']
  %s0 = inlined_call_operand.hbm [shape: f32[2,32,256], index: 0, kind: input, shape index: {}]
  %s1 = inlined_call_operand.vmem [shape: f32[32,2], index: 1, kind: input, shape index: {}]
  %s2 = inlined_call_operand.vmem [shape: f32[1,2], index: 2, kind: input, shape index: {}]
  %s3 = inlined_call_operand.vmem [shape: f32[2,32], index: 3, kind: input, shape index: {}]
  %s4 = inlined_call_operand.vmem [shape: f32[1,32], index: 4, kind: input, shape index: {}]
  %s5 = inlined_call_operand.hbm [shape: f32[2,32,256], index: 5, kind: output, shape index: {}]
  %s6 = sld [smem:[#allocation0]]
  $region57: #{tpu_custom_call.1} parent=0
    _
  %s8 = ssub.s32 1, %s6
  %s9 = scalar_select 0, %s8, %s6
  $region1: #{tpu_custom_call.1} parent=0
    #allocation2 [shape = 'u8[65536]{0}', space=vmem, size = 0x10000, scoped, tag = 'input window, operand 0']
    #allocation3 [shape = 's32[2]{0}', space=sflag, size = 0x8, scoped, tag = 'scoped memory for tpu_custom_call.1']
    #allocation4 [shape = 's32[2]{0}', space=sflag, size = 0x8, scoped, tag = 'scoped memory for tpu_custom_call.1']
    #allocation5 [shape = 'u8[65536]{0}', space=vmem, size = 0x10000, scoped, tag = 'output window, operand 0']
    %10 = vsyncpa [#allocation3], 0
    %s11 = scalar_lea.sflag [#allocation3], 1
    %12 = vsyncpa %s11, 0
    %13 = vsyncpa [#allocation4], 0
    %s14 = scalar_lea.sflag [#allocation4], 1
    %15 = vsyncpa %s14, 0
    loop: start=0, step=1, limit=4
    $region2: #{tpu_custom_call.1} parent=1 // loop_pre_header
      _
    $region3: #{tpu_custom_call.1} parent=1 // loop_header
      %s17 = sphi 0, %s21
      %p18 = scmp.ge.s32.totalorder %s17, 4
      %s27 = sphi 0, %s29
      %s30 = sphi 0, %s27
      %s31 = sphi 0, %s30
      %s47 = sphi 0, %s31
      %s51 = sphi 0, %s51
      %s53 = sphi 0, %s51
      %s54 = sphi 0, %s53
      %s68 = sphi 0, %s54
      %s72 = sphi 0, %s72
      %s74 = sphi 0, %s72
      %s75 = sphi 0, %s74
      %s89 = sphi 0, %s75
      %s93 = sphi 0, %s93
      %s95 = sphi 0, %s93
      %s96 = sphi 0, %s95
      %s110 = sphi 0, %s96
      %s114 = sphi 0, %s114
      %s116 = sphi 0, %s114
      %s117 = sphi 0, %s116
      %s131 = sphi 0, %s117
      %s137 = sphi 0, %s139
      %s140 = sphi 0, %s137
      %s141 = sphi 0, %s140
      %s157 = sphi 0, %s141
    $region4: #{tpu_custom_call.1} parent=1 // loop_header_branch
      %20 = sbr.rel (%p18) target = $region8
    $region5: #{tpu_custom_call.1} parent=1 // loop_body
      %s22 = ssub.s32 %s17, 1
      %s23 = ssub.s32 %s17, 2
      %s24 = sadd.s32 %s17, 1
      %s25 = ssub.s32 %s17, %s24
      %p26 = scmp.eq.s32.totalorder %s25, 0
      %s28 = sadd.s32 %s27, 1
      %s29 = scalar_select %p26, %s27, %s28
      %p32 = pneg %p26
      %p33 = scmp.eq.s32.totalorder %s17, 1
      %p34 = por %p32, %p33
      %p35 = scmp.ne.s32.totalorder %s27, %s30
      %p36 = scmp.eq.s32.totalorder %s17, 0
      %p37 = por %p35, %p36
      %p38 = scmp.ne.s32.totalorder %s27, %s30
      %p39 = scmp.eq.s32.totalorder %s22, 1
      %p40 = por %p38, %p39
      %p41 = scmp.ne.s32.totalorder %s30, %s31
      %p42 = scmp.eq.s32.totalorder %s22, 0
      %p43 = por %p41, %p42
      %p44 = scmp.ne.s32.totalorder %s30, %s31
      %p45 = scmp.eq.s32.totalorder %s23, 1
      %p46 = por %p44, %p45
      %p48 = scmp.ne.s32.totalorder %s31, %s47
      %p49 = scmp.eq.s32.totalorder %s23, 0
      %p50 = por %p48, %p49
      %s52 = sadd.s32 %s51, 1
      %p55 = scmp.eq.s32.totalorder %s17, 1
      %p56 = scmp.ne.s32.totalorder %s51, %s53
      %p57 = scmp.eq.s32.totalorder %s17, 0
      %p58 = por %p56, %p57
      %p59 = scmp.ne.s32.totalorder %s51, %s53
      %p60 = scmp.eq.s32.totalorder %s22, 1
      %p61 = por %p59, %p60
      %p62 = scmp.ne.s32.totalorder %s53, %s54
      %p63 = scmp.eq.s32.totalorder %s22, 0
      %p64 = por %p62, %p63
      %p65 = scmp.ne.s32.totalorder %s53, %s54
      %p66 = scmp.eq.s32.totalorder %s23, 1
      %p67 = por %p65, %p66
      %p69 = scmp.ne.s32.totalorder %s54, %s68
      %p70 = scmp.eq.s32.totalorder %s23, 0
      %p71 = por %p69, %p70
      %s73 = sadd.s32 %s72, 1
      %p76 = scmp.eq.s32.totalorder %s17, 1
      %p77 = scmp.ne.s32.totalorder %s72, %s74
      %p78 = scmp.eq.s32.totalorder %s17, 0
      %p79 = por %p77, %p78
      %p80 = scmp.ne.s32.totalorder %s72, %s74
      %p81 = scmp.eq.s32.totalorder %s22, 1
      %p82 = por %p80, %p81
      %p83 = scmp.ne.s32.totalorder %s74, %s75
      %p84 = scmp.eq.s32.totalorder %s22, 0
      %p85 = por %p83, %p84
      %p86 = scmp.ne.s32.totalorder %s74, %s75
      %p87 = scmp.eq.s32.totalorder %s23, 1
      %p88 = por %p86, %p87
      %p90 = scmp.ne.s32.totalorder %s75, %s89
      %p91 = scmp.eq.s32.totalorder %s23, 0
      %p92 = por %p90, %p91
      %s94 = sadd.s32 %s93, 1
      %p97 = scmp.eq.s32.totalorder %s17, 1
      %p98 = scmp.ne.s32.totalorder %s93, %s95
      %p99 = scmp.eq.s32.totalorder %s17, 0
      %p100 = por %p98, %p99
      %p101 = scmp.ne.s32.totalorder %s93, %s95
      %p102 = scmp.eq.s32.totalorder %s22, 1
      %p103 = por %p101, %p102
      %p104 = scmp.ne.s32.totalorder %s95, %s96
      %p105 = scmp.eq.s32.totalorder %s22, 0
      %p106 = por %p104, %p105
      %p107 = scmp.ne.s32.totalorder %s95, %s96
      %p108 = scmp.eq.s32.totalorder %s23, 1
      %p109 = por %p107, %p108
      %p111 = scmp.ne.s32.totalorder %s96, %s110
      %p112 = scmp.eq.s32.totalorder %s23, 0
      %p113 = por %p111, %p112
      %s115 = sadd.s32 %s114, 1
      %p118 = scmp.eq.s32.totalorder %s17, 1
      %p119 = scmp.ne.s32.totalorder %s114, %s116
      %p120 = scmp.eq.s32.totalorder %s17, 0
      %p121 = por %p119, %p120
      %p122 = scmp.ne.s32.totalorder %s114, %s116
      %p123 = scmp.eq.s32.totalorder %s22, 1
      %p124 = por %p122, %p123
      %p125 = scmp.ne.s32.totalorder %s116, %s117
      %p126 = scmp.eq.s32.totalorder %s22, 0
      %p127 = por %p125, %p126
      %p128 = scmp.ne.s32.totalorder %s116, %s117
      %p129 = scmp.eq.s32.totalorder %s23, 1
      %p130 = por %p128, %p129
      %p132 = scmp.ne.s32.totalorder %s117, %s131
      %p133 = scmp.eq.s32.totalorder %s23, 0
      %p134 = por %p132, %p133
      %s135 = ssub.s32 %s17, %s24
      %p136 = scmp.eq.s32.totalorder %s135, 0
      %s138 = sadd.s32 %s137, 1
      %s139 = scalar_select %p136, %s137, %s138
      %p142 = pneg %p136
      %p143 = scmp.eq.s32.totalorder %s17, 1
      %p144 = por %p142, %p143
      %p145 = scmp.ne.s32.totalorder %s137, %s140
      %p146 = scmp.eq.s32.totalorder %s17, 0
      %p147 = por %p145, %p146
      %p148 = scmp.ne.s32.totalorder %s137, %s140
      %p149 = scmp.eq.s32.totalorder %s22, 1
      %p150 = por %p148, %p149
      %p151 = scmp.ne.s32.totalorder %s140, %s141
      %p152 = scmp.eq.s32.totalorder %s22, 0
      %p153 = por %p151, %p152
      %p154 = scmp.ne.s32.totalorder %s140, %s141
      %p155 = scmp.eq.s32.totalorder %s23, 1
      %p156 = por %p154, %p155
      %p158 = scmp.ne.s32.totalorder %s141, %s157
      %p159 = scmp.eq.s32.totalorder %s23, 0
      %p160 = por %p158, %p159
      %p161 = scmp.le.s32.totalorder 1, %s17
      %p162 = scmp.lt.s32.totalorder %s17, 3
      %p163 = pnand %p161, %p162
      %p164 = pneg %p163
      // Predicated region
      $region9: #{tpu_custom_call.1} parent=5 // pred_check
        _
      $region10: #{tpu_custom_call.1} parent=5 // pred_check_branch
        %166 = sbr.rel (%p163) target = $region12
      $region11: #{tpu_custom_call.1} parent=5 // pred_region
        %s167 = ssub.s32 %s17, 1
        // Predicated region
        $region13: #{tpu_custom_call.1} parent=11 // pred_check
          %p168 = pneg %p64
        $region14: #{tpu_custom_call.1} parent=11 // pred_check_branch
          %170 = sbr.rel (%p168) target = $region16
        $region15: #{tpu_custom_call.1} parent=11 // pred_region
          _
        $region16: #{tpu_custom_call.1} parent=11 // pred_fallthru
          _
        // Predicated region
        $region17: #{tpu_custom_call.1} parent=11 // pred_check
          %p171 = pneg %p85
        $region18: #{tpu_custom_call.1} parent=11 // pred_check_branch
          %173 = sbr.rel (%p171) target = $region20
        $region19: #{tpu_custom_call.1} parent=11 // pred_region
          _
        $region20: #{tpu_custom_call.1} parent=11 // pred_fallthru
          _
        // Predicated region
        $region21: #{tpu_custom_call.1} parent=11 // pred_check
          %p174 = pneg %p106
        $region22: #{tpu_custom_call.1} parent=11 // pred_check_branch
          %176 = sbr.rel (%p174) target = $region24
        $region23: #{tpu_custom_call.1} parent=11 // pred_region
          _
        $region24: #{tpu_custom_call.1} parent=11 // pred_fallthru
          _
        // Predicated region
        $region25: #{tpu_custom_call.1} parent=11 // pred_check
          %p177 = pneg %p127
        $region26: #{tpu_custom_call.1} parent=11 // pred_check_branch
          %179 = sbr.rel (%p177) target = $region28
        $region27: #{tpu_custom_call.1} parent=11 // pred_region
          _
        $region28: #{tpu_custom_call.1} parent=11 // pred_fallthru
          _
      $region12: #{tpu_custom_call.1} parent=5 // pred_fallthru
        _
      %p180 = scmp.lt.s32.totalorder %s17, 2
      // Predicated region
      $region29: #{tpu_custom_call.1} parent=5 // pred_check
        %p181 = pneg %p180
      $region30: #{tpu_custom_call.1} parent=5 // pred_check_branch
        %183 = sbr.rel (%p181) target = $region32
      $region31: #{tpu_custom_call.1} parent=5 // pred_region
        // Predicated region
        $region33: #{tpu_custom_call.1} parent=31 // pred_check
          %p184 = pneg %p37
        $region34: #{tpu_custom_call.1} parent=31 // pred_check_branch
          %186 = sbr.rel (%p184) target = $region36
        $region35: #{tpu_custom_call.1} parent=31 // pred_region
          %s187 = sand.u32 %s27, 1
          %s188 = scalar_lea.sflag [#allocation3], %s187
          %s189 = sand.u32 %s27, 1
          %s190 = smul.addr %s189, 64
          %s191 = scalar_lea.vmem [#allocation2], %s190
          %s193 = ssub.s32 1024, 1024
          %194 = vsyncadd %s188, %s193
          %s195 = smul.addr %s17, 8
          %s196 = smul.addr %s195, 128
          %s197 = scalar_lea.hbm %s0, %s196
          %s198 = sshll.u32 %s191, 4
          %s199 = int_to_ptr.vmem [resolvable:$true] %s198
          %204 = dma.hbm_to_vmem [thread:$0]  %s197, 1024, %s199, %s188, 256, 256, 16
        $region36: #{tpu_custom_call.1} parent=31 // pred_fallthru
          _
      $region32: #{tpu_custom_call.1} parent=5 // pred_fallthru
        _
      %p205 = scmp.le.s32.totalorder 1, %s17
      %p206 = scmp.lt.s32.totalorder %s17, 3
      %p207 = pnand %p205, %p206
      %p208 = pneg %p207
      // Predicated region
      $region37: #{tpu_custom_call.1} parent=5 // pred_check
        _
      $region38: #{tpu_custom_call.1} parent=5 // pred_check_branch
        %210 = sbr.rel (%p207) target = $region40
      $region39: #{tpu_custom_call.1} parent=5 // pred_region
        %s211 = ssub.s32 %s17, 1
        %s212 = sand.u32 %s30, 1
        %s213 = scalar_lea.sflag [#allocation3], %s212
        %s214 = sand.u32 %s30, 1
        %s215 = smul.addr %s214, 64
        %s216 = scalar_lea.vmem [#allocation2], %s215
        // Predicated region
        $region41: #{tpu_custom_call.1} parent=39 // pred_check
          %p217 = pneg %p43
        $region42: #{tpu_custom_call.1} parent=39 // pred_check_branch
          %219 = sbr.rel (%p217) target = $region44
        $region43: #{tpu_custom_call.1} parent=39 // pred_region
          %220 = dma.done %s213, 1024
        $region44: #{tpu_custom_call.1} parent=39 // pred_fallthru
          _
        %s221 = sand.u32 %s30, 1
        %s222 = scalar_lea.sflag [#allocation3], %s221
        %s223 = sand.u32 %s30, 1
        %s224 = smul.addr %s223, 64
        %s225 = scalar_lea.vmem [#allocation2], %s224
        %p226 = pneg %p43
        %p227 = pneg %p40
        %p228 = pneg %p64
        %p229 = pneg %p61
        %p230 = pneg %p85
        %p231 = pneg %p82
        %p232 = pneg %p106
        %p233 = pneg %p103
        %p234 = pneg %p127
        %p235 = pneg %p124
        %p236 = pneg %p153
        %p237 = pneg %p150
        %s238 = sand.u32 %s140, 1
        %s239 = scalar_lea.sflag [#allocation4], %s238
        %s240 = sand.u32 %s140, 1
        %s241 = smul.addr %s240, 64
        %s242 = scalar_lea.vmem [#allocation5], %s241
        %v243 = vld [vmem:[%s216] sm:$0xff]
        %v244 = vld [vmem:[%s216 + $0x8] sm:$0xff]
        %v245 = vld [vmem:[%s216 + $0x10] sm:$0xff]
        %v246 = vld [vmem:[%s216 + $0x18] sm:$0xff]
        %v247 = vld [vmem:[%s216 + $0x20] sm:$0xff]
        %v248 = vld [vmem:[%s216 + $0x28] sm:$0xff]
        %v249 = vld [vmem:[%s216 + $0x30] sm:$0xff]
        %v250 = vld [vmem:[%s216 + $0x38] sm:$0xff]
        %v251 = vadd.f32 %v243, %v244
        %252 = vadd.xlane.f32.xlu0 %v251
        %v253 = vpop.xlane.xlu0 %252
        %v254 = vadd.f32 %v245, %v246
        %255 = vadd.xlane.f32.xlu0 %v254
        %v256 = vpop.xlane.xlu0 %255
        %v257 = vadd.f32 %v247, %v248
        %258 = vadd.xlane.f32.xlu0 %v257
        %v259 = vpop.xlane.xlu0 %258
        %v260 = vadd.f32 %v249, %v250
        %261 = vadd.xlane.f32.xlu0 %v260
        %v262 = vpop.xlane.xlu0 %261
        %v263 = vrcp.pop 256.0
        %v264 = vmul.f32 %v253, %v263
        %v265 = vmul.f32 %v256, %v263
        %v266 = vmul.f32 %v259, %v263
        %v267 = vmul.f32 %v262, %v263
        %v268 = vmax.f32 %v243, %v244
        %269 = vmax.xlane.f32.xlu0 %v268
        %v270 = vpop.xlane.xlu0 %269
        %v271 = vmax.f32 %v245, %v246
        %272 = vmax.xlane.f32.xlu0 %v271
        %v273 = vpop.xlane.xlu0 %272
        %v274 = vmax.f32 %v247, %v248
        %275 = vmax.xlane.f32.xlu0 %v274
        %v276 = vpop.xlane.xlu0 %275
        %v277 = vmax.f32 %v249, %v250
        %278 = vmax.xlane.f32.xlu0 %v277
        %v279 = vpop.xlane.xlu0 %278
        %v280 = vld [vmem:[%s1] sm:$0xff]
        %v281 = vld [vmem:[%s1 + $0x8] sm:$0xff]
        %v282 = vld [vmem:[%s1 + $0x10] sm:$0xff]
        %v283 = vld [vmem:[%s1 + $0x18] sm:$0xff]
        %v284 = vld [vmem:[%s2] sm:$0x1]
        %v285 = vld [vmem:[%s3] sm:$0x3]
        %v286 = vld [vmem:[%s4] sm:$0x1]
        %v291 = vlaneseq
        %v292 = vand.u32 %v291, 127
        %v293 = vlaneseq
        %v294 = vshrl.u32 %v293, 7
        %v295 = vsub.s32 %v292, %v294
        %v296 = vrot.slane %v264, %v295
        %v297 = vadd.s32 %v292, 4294967288
        %v298 = vlaneseq
        %v299 = vshrl.u32 %v298, 7
        %v300 = vsub.s32 %v297, %v299
        %v301 = vrot.slane %v265, %v300
        %vm302 = vcmask 130112
        %v303 = vsel %vm302, %v301, %v296
        %v304 = vadd.s32 %v292, 4294967280
        %v305 = vlaneseq
        %v306 = vshrl.u32 %v305, 7
        %v307 = vsub.s32 %v304, %v306
        %v308 = vrot.slane %v266, %v307
        %vm309 = vcmask 195712
        %v310 = vsel %vm309, %v308, %v303
        %v311 = vadd.s32 %v292, 4294967272
        %v312 = vlaneseq
        %v313 = vshrl.u32 %v312, 7
        %v314 = vsub.s32 %v311, %v313
        %v315 = vrot.slane %v267, %v314
        %vm316 = vcmask 261312
        %v317 = vsel %vm316, %v315, %v310
        %v323 = vlaneseq
        %v324 = vshrl.u32 %v323, 7
        %v325 = vsub.s32 %v292, %v324
        %v326 = vrot.slane %v270, %v325
        %v327 = vlaneseq
        %v328 = vshrl.u32 %v327, 7
        %v329 = vsub.s32 %v297, %v328
        %v330 = vrot.slane %v273, %v329
        %v331 = vsel %vm302, %v330, %v326
        %v332 = vlaneseq
        %v333 = vshrl.u32 %v332, 7
        %v334 = vsub.s32 %v304, %v333
        %v335 = vrot.slane %v276, %v334
        %v336 = vsel %vm309, %v335, %v331
        %v337 = vlaneseq
        %v338 = vshrl.u32 %v337, 7
        %v339 = vsub.s32 %v311, %v338
        %v340 = vrot.slane %v279, %v339
        %v341 = vsel %vm316, %v340, %v336
        %vm343 = vcmask 1040384
        %v344 = vsel %vm343, %v317, %v341
        %v346 = vlaneseq
        %v347 = vshrl.u32 %v346, 7
        %v348 = vsub.s32 0, %v347
        %v349 = vrot.slane %v284, %v348
        %vm351 = vcmask 261120
        %v353 = vsel %vm351, %v344, 0
        %355 = vmatprep.subr.mxu0 0.0
        %356 = vmatpush1.msra.mxu0 %v280
        %357 = vmatprep.subr.mxu0 0.0
        %358 = vmatpush1.msra.mxu0 %v281
        %359 = vmatprep.subr.mxu0 0.0
        %360 = vmatpush1.msra.mxu0 %v282
        %361 = vmatprep.subr.mxu0 0.0
        %362 = vmatpush1.msra.mxu0 %v283
        %363 = vmatprep.subr.mxu0 0.0
        %364 = vmatpush1.msra.mxu0 0.0
        %365 = vmatprep.subr.mxu0 0.0
        %366 = vmatpush1.msra.mxu0 0.0
        %367 = vmatprep.subr.mxu0 0.0
        %368 = vmatpush1.msra.mxu0 0.0
        %369 = vmatprep.subr.mxu0 0.0
        %370 = vmatpush1.msra.mxu0 0.0
        %371 = vmatprep.subr.mxu0 0.0
        %372 = vmatpush1.msra.mxu0 0.0
        %373 = vmatprep.subr.mxu0 0.0
        %374 = vmatpush1.msra.mxu0 0.0
        %375 = vmatprep.subr.mxu0 0.0
        %376 = vmatpush1.msra.mxu0 0.0
        %377 = vmatprep.subr.mxu0 0.0
        %378 = vmatpush1.msra.mxu0 0.0
        %379 = vmatprep.subr.mxu0 0.0
        %380 = vmatpush1.msra.mxu0 0.0
        %381 = vmatprep.subr.mxu0 0.0
        %382 = vmatpush1.msra.mxu0 0.0
        %383 = vmatprep.subr.mxu0 0.0
        %384 = vmatpush1.msra.mxu0 0.0
        %385 = vmatprep.subr.mxu0 0.0
        %386 = vmatpush1.msra.mxu0 0.0
        %387 = vmatprep.subr.mxu0 0.0
        %388 = vmatpush1.msra.mxu0 0.0
        %389 = vmatprep.subr.mxu0 0.0
        %390 = vmatpush1.msra.mxu0 0.0
        %391 = vmatprep.subr.mxu0 0.0
        %392 = vmatpush1.msra.mxu0 0.0
        %393 = vmatprep.subr.mxu0 0.0
        %394 = vmatpush1.msra.mxu0 0.0
        %395 = vmatprep.subr.mxu0 0.0
        %396 = vmatpush1.msra.mxu0 0.0
        %397 = vmatprep.subr.mxu0 0.0
        %398 = vmatpush1.msra.mxu0 0.0
        %399 = vmatprep.subr.mxu0 0.0
        %400 = vmatpush1.msra.mxu0 0.0
        %401 = vmatprep.subr.mxu0 0.0
        %402 = vmatpush1.msra.mxu0 0.0
        %403 = vmatprep.subr.mxu0 0.0
        %404 = vmatpush1.msra.mxu0 0.0
        %405 = vmatprep.subr.mxu0 0.0
        %406 = vmatpush1.msra.mxu0 0.0
        %407 = vmatprep.subr.mxu0 0.0
        %408 = vmatpush1.msra.mxu0 0.0
        %409 = vmatprep.subr.mxu0 0.0
        %410 = vmatpush1.msra.mxu0 0.0
        %411 = vmatprep.subr.mxu0 0.0
        %412 = vmatpush1.msra.mxu0 0.0
        %413 = vmatprep.subr.mxu0 0.0
        %414 = vmatpush1.msra.mxu0 0.0
        %415 = vmatprep.subr.mxu0 0.0
        %416 = vmatpush1.msra.mxu0 0.0
        %417 = vmatprep.subr.mxu0 0.0
        %418 = vmatpush1.msra.mxu0 0.0
        %419 = vmatprep.mubr.f32.mxu0 0.0
        %420 = vmatmul.mubr.f32.gmra.mrb[0].mxu0 %v353
        %v421 = vpop.f32.mrb[0].mxu0
        %v422 = vadd.f32 %v349, %v421
        %v423 = vpop.f32.mrb[0].mxu0
        %424 = vdwg.mxu0
        %v425 = vmax.f32 %v422, 0.0
        %v427 = vlaneseq
        %v428 = vshrl.u32 %v427, 7
        %v429 = vsub.s32 0, %v428
        %v430 = vrot.slane %v286, %v429
        %vm432 = vcmask 15360
        %v434 = vsel %vm432, %v425, 0
        %vm436 = vcmask 1041408
        %v438 = vsel %vm436, %v285, 0
        %440 = vmatprep.subr.mxu0 0.0
        %441 = vmatpush1.msra.mxu0 %v438
        %442 = vmatprep.subr.mxu0 0.0
        %443 = vmatpush1.msra.mxu0 0.0
        %444 = vmatprep.subr.mxu0 0.0
        %445 = vmatpush1.msra.mxu0 0.0
        %446 = vmatprep.subr.mxu0 0.0
        %447 = vmatpush1.msra.mxu0 0.0
        %448 = vmatprep.subr.mxu0 0.0
        %449 = vmatpush1.msra.mxu0 0.0
        %450 = vmatprep.subr.mxu0 0.0
        %451 = vmatpush1.msra.mxu0 0.0
        %452 = vmatprep.subr.mxu0 0.0
        %453 = vmatpush1.msra.mxu0 0.0
        %454 = vmatprep.subr.mxu0 0.0
        %455 = vmatpush1.msra.mxu0 0.0
        %456 = vmatprep.subr.mxu0 0.0
        %457 = vmatpush1.msra.mxu0 0.0
        %458 = vmatprep.subr.mxu0 0.0
        %459 = vmatpush1.msra.mxu0 0.0
        %460 = vmatprep.subr.mxu0 0.0
        %461 = vmatpush1.msra.mxu0 0.0
        %462 = vmatprep.subr.mxu0 0.0
        %463 = vmatpush1.msra.mxu0 0.0
        %464 = vmatprep.subr.mxu0 0.0
        %465 = vmatpush1.msra.mxu0 0.0
        %466 = vmatprep.subr.mxu0 0.0
        %467 = vmatpush1.msra.mxu0 0.0
        %468 = vmatprep.subr.mxu0 0.0
        %469 = vmatpush1.msra.mxu0 0.0
        %470 = vmatprep.subr.mxu0 0.0
        %471 = vmatpush1.msra.mxu0 0.0
        %472 = vmatprep.subr.mxu0 0.0
        %473 = vmatpush1.msra.mxu0 0.0
        %474 = vmatprep.subr.mxu0 0.0
        %475 = vmatpush1.msra.mxu0 0.0
        %476 = vmatprep.subr.mxu0 0.0
        %477 = vmatpush1.msra.mxu0 0.0
        %478 = vmatprep.subr.mxu0 0.0
        %479 = vmatpush1.msra.mxu0 0.0
        %480 = vmatprep.subr.mxu0 0.0
        %481 = vmatpush1.msra.mxu0 0.0
        %482 = vmatprep.subr.mxu0 0.0
        %483 = vmatpush1.msra.mxu0 0.0
        %484 = vmatprep.subr.mxu0 0.0
        %485 = vmatpush1.msra.mxu0 0.0
        %486 = vmatprep.subr.mxu0 0.0
        %487 = vmatpush1.msra.mxu0 0.0
        %488 = vmatprep.subr.mxu0 0.0
        %489 = vmatpush1.msra.mxu0 0.0
        %490 = vmatprep.subr.mxu0 0.0
        %491 = vmatpush1.msra.mxu0 0.0
        %492 = vmatprep.subr.mxu0 0.0
        %493 = vmatpush1.msra.mxu0 0.0
        %494 = vmatprep.subr.mxu0 0.0
        %495 = vmatpush1.msra.mxu0 0.0
        %496 = vmatprep.subr.mxu0 0.0
        %497 = vmatpush1.msra.mxu0 0.0
        %498 = vmatprep.subr.mxu0 0.0
        %499 = vmatpush1.msra.mxu0 0.0
        %500 = vmatprep.subr.mxu0 0.0
        %501 = vmatpush1.msra.mxu0 0.0
        %502 = vmatprep.subr.mxu0 0.0
        %503 = vmatpush1.msra.mxu0 0.0
        %504 = vmatprep.mubr.f32.mxu0 0.0
        %505 = vmatmul.mubr.f32.gmra.mrb[0].mxu0 %v434
        %v506 = vpop.f32.mrb[0].mxu0
        %v507 = vadd.f32 %v430, %v506
        %v508 = vpop.f32.mrb[0].mxu0
        %509 = vdwg.mxu0
        %v511 = vrot.slane %v507, 1
        %v513 = vadd.f32 %v507, %v511
        %v514 = vxor.u32 %v513, 2147483648
        %v515 = vmul.f32 %v514, 1.442695
        %v516 = vpow.pop %v515
        %v517 = vadd.f32 %v516, 1.0
        %v518 = vrcp.pop %v517
        %v519 = vmul.f32 1.0, %v518
        %v520 = vlaneseq
        %v521 = vshrl.u32 %v520, 7
        %v522 = vsub.s32 0, %v521
        %v523 = vrot.slane %v519, %v522
        %525 = vbcast.lane.b32.xlu0 %v523, 256
        %v526 = vpop.permute.xlu0 %525
        %s528 = sor.u32 256, 8
        %529 = vbcast.lane.b32.xlu0 %v523, %s528
        %v530 = vpop.permute.xlu0 %529
        %s532 = sor.u32 256, 16
        %533 = vbcast.lane.b32.xlu0 %v523, %s532
        %v534 = vpop.permute.xlu0 %533
        %s536 = sor.u32 256, 24
        %537 = vbcast.lane.b32.xlu0 %v523, %s536
        %v538 = vpop.permute.xlu0 %537
        %v539 = vmul.f32 %v243, %v526
        %v540 = vmul.f32 %v244, %v526
        %v541 = vmul.f32 %v245, %v530
        %v542 = vmul.f32 %v246, %v530
        %v543 = vmul.f32 %v247, %v534
        %v544 = vmul.f32 %v248, %v534
        %v545 = vmul.f32 %v249, %v538
        %v546 = vmul.f32 %v250, %v538
        %547 = vst [vmem:[%s242] sm:$0xff] %v539
        %548 = vst [vmem:[%s242 + $0x8] sm:$0xff] %v540
        %549 = vst [vmem:[%s242 + $0x10] sm:$0xff] %v541
        %550 = vst [vmem:[%s242 + $0x18] sm:$0xff] %v542
        %551 = vst [vmem:[%s242 + $0x20] sm:$0xff] %v543
        %552 = vst [vmem:[%s242 + $0x28] sm:$0xff] %v544
        %553 = vst [vmem:[%s242 + $0x30] sm:$0xff] %v545
        %554 = vst [vmem:[%s242 + $0x38] sm:$0xff] %v546
        %s555 = sand.u32 %s140, 1
        %s556 = scalar_lea.sflag [#allocation4], %s555
        %s557 = sand.u32 %s140, 1
        %s558 = smul.addr %s557, 64
        %s559 = scalar_lea.vmem [#allocation5], %s558
        // Predicated region
        $region45: #{tpu_custom_call.1} parent=39 // pred_check
          %p560 = pneg %p150
        $region46: #{tpu_custom_call.1} parent=39 // pred_check_branch
          %562 = sbr.rel (%p560) target = $region48
        $region47: #{tpu_custom_call.1} parent=39 // pred_region
          %s564 = ssub.s32 1024, 1024
          %565 = vsyncadd %s556, %s564
          %s566 = smul.addr %s22, 8
          %s567 = smul.addr %s566, 128
          %s568 = scalar_lea.hbm %s5, %s567
          %s569 = sshll.u32 %s559, 4
          %s570 = int_to_ptr.vmem [resolvable:$true] %s569
          %575 = dma.vmem_to_hbm [thread:$0]  %s570, 1024, %s568, %s556, 256, 256, 16
        $region48: #{tpu_custom_call.1} parent=39 // pred_fallthru
          _
      $region40: #{tpu_custom_call.1} parent=5 // pred_fallthru
        _
      %p576 = scmp.le.s32.totalorder 2, %s17
      // Predicated region
      $region49: #{tpu_custom_call.1} parent=5 // pred_check
        %p577 = pneg %p576
      $region50: #{tpu_custom_call.1} parent=5 // pred_check_branch
        %579 = sbr.rel (%p577) target = $region52
      $region51: #{tpu_custom_call.1} parent=5 // pred_region
        %s580 = ssub.s32 %s17, 2
        // Predicated region
        $region53: #{tpu_custom_call.1} parent=51 // pred_check
          %p581 = pneg %p156
        $region54: #{tpu_custom_call.1} parent=51 // pred_check_branch
          %583 = sbr.rel (%p581) target = $region56
        $region55: #{tpu_custom_call.1} parent=51 // pred_region
          %s584 = sand.u32 %s141, 1
          %s585 = scalar_lea.sflag [#allocation4], %s584
          %s586 = sand.u32 %s141, 1
          %s587 = smul.addr %s586, 64
          %s588 = scalar_lea.vmem [#allocation5], %s587
          %589 = dma.done %s585, 1024
        $region56: #{tpu_custom_call.1} parent=51 // pred_fallthru
          _
      $region52: #{tpu_custom_call.1} parent=5 // pred_fallthru
        _
    $region6: #{tpu_custom_call.1} parent=1 // loop_footer
      %s21 = sadd.s32 1, %s17
    $region7: #{tpu_custom_call.1} parent=1 // loop_footer_branch
      %16 = sbr.rel target = $region3
    $region8: #{tpu_custom_call.1} parent=1 // loop_exit
      _
    %590 = vsyncpa [#allocation3], 1
    %s591 = scalar_lea.sflag [#allocation3], 1
    %592 = vsyncpa %s591, 1
    %593 = vsyncpa [#allocation4], 1
    %s594 = scalar_lea.sflag [#allocation4], 1
    %595 = vsyncpa %s594, 1

</llo_original>
